<compile_context>
chip_gen: v7x
topology: tpu7x:2x2x1
jax: 0.10.0
libtpu: 0.0.40
codegen_flags: <defaults>
</compile_context>

<pallas_src>
import functools

import jax
import jax.numpy as jnp
from jax.experimental import pallas as pl
from jax.experimental.pallas import tpu as pltpu


def _round_up(x, m):
    return (x + m - 1) // m * m


def _mlp_kernel(x_ref, w1_ref, b1_ref, w2_ref, b2_ref, out_ref):
    # Linear 1 on the MXU: bf16 operands, f32 accumulation.
    x = x_ref[...].astype(jnp.bfloat16)
    h = jnp.dot(x, w1_ref[...], preferred_element_type=jnp.float32)
    # f32 epilogue on the VPU: bias + ReLU.
    h = jnp.maximum(h + b1_ref[...], 0.0)
    # Linear 2 on the MXU: bf16 operands, f32 accumulation.
    y = jnp.dot(h.astype(jnp.bfloat16), w2_ref[...],
                preferred_element_type=jnp.float32)
    out_ref[...] = (y + b2_ref[...]).astype(out_ref.dtype)


def prepare_params(w1, b1, w2, b2, *, lane=128):
    """One-time parameter re-layout (hoisted out of the per-call hot path).

    PyTorch nn.Linear stores (out_features, in_features); the kernel wants
    (in, out) bf16 weights, with the final output dim zero-padded up to a
    lane-dense multiple of 128 so output stores are unmasked.
    """
    h_dim, d_in = w1.shape
    d_out = int(w2.shape[0])
    d_out_p = _round_up(d_out, lane)

    w1_t = jnp.asarray(w1.T, dtype=jnp.bfloat16)                   # (D_in, H)
    w2_t = jnp.zeros((h_dim, d_out_p), dtype=jnp.bfloat16)
    w2_t = w2_t.at[:, :d_out].set(w2.T.astype(jnp.bfloat16))       # (H, D_out_p)
    b1_2d = jnp.asarray(b1, jnp.float32).reshape(1, h_dim)         # (1, H)
    b2_2d = jnp.zeros((1, d_out_p), dtype=jnp.float32)
    b2_2d = b2_2d.at[:, :d_out].set(jnp.asarray(b2, jnp.float32))  # (1, D_out_p)
    return w1_t, b1_2d, w2_t, b2_2d, d_out


@functools.partial(jax.jit, static_argnames=("d_out", "block_m"))
def custom_sequential_forward(x, w1_t, b1_2d, w2_t, b2_2d, *, d_out, block_m=512):
    """Fused Linear -> ReLU -> Linear.

    x     : (B, D_in)       float32
    w1_t  : (D_in, H)       bf16   (pre-transposed, from prepare_params)
    b1_2d : (1, H)          f32
    w2_t  : (H, D_out_p)    bf16   (pre-transposed + lane-padded)
    b2_2d : (1, D_out_p)    f32
    returns (B, d_out)      x.dtype
    """
    B, d_in = x.shape
    h_dim = w1_t.shape[1]
    d_out_p = w2_t.shape[1]

    # Batch tile: multiple of 8 sublanes, at most block_m; pad B so every
    # grid step is a full tile (no masked stores on the batch edge).
    tm = min(_round_up(block_m, 8), _round_up(B, 8))
    m_pad = _round_up(B, tm)
    x_p = x if m_pad == B else jnp.pad(x, ((0, m_pad - B), (0, 0)))
    grid = (m_pad // tm,)

    # VMEM budget: double-buffered x/out tiles + resident bf16 weights +
    # f32 biases + f32 intermediate h, with 4x headroom; capped at 48 MiB so
    # it remains legal under v7x's 64 MiB-per-TC VMEM.
    vmem_est = (
        2 * tm * d_in * 4 + 2 * tm * d_out_p * 4          # x / out double buffers
        + (d_in * h_dim + h_dim * d_out_p) * 2            # bf16 weights (resident)
        + (h_dim + d_out_p) * 4                           # f32 biases (resident)
        + tm * h_dim * 4                                  # f32 intermediate h
    )
    vmem_limit = int(min(max(4 * vmem_est, 8 << 20), 48 << 20))

    flops = 2 * m_pad * d_in * h_dim + 2 * m_pad * h_dim * d_out_p
    bytes_accessed = (
        m_pad * d_in * 4 + m_pad * d_out_p * 4
        + (d_in * h_dim + h_dim * d_out_p) * 2 + (h_dim + d_out_p) * 4
    )

    out_p = pl.pallas_call(
        _mlp_kernel,
        out_shape=jax.ShapeDtypeStruct((m_pad, d_out_p), x.dtype),
        grid=grid,
        in_specs=[
            pl.BlockSpec((tm, d_in), lambda i: (i, 0)),        # streamed x tile
            pl.BlockSpec((d_in, h_dim), lambda i: (0, 0)),     # resident W1
            pl.BlockSpec((1, h_dim), lambda i: (0, 0)),        # resident b1
            pl.BlockSpec((h_dim, d_out_p), lambda i: (0, 0)),  # resident W2
            pl.BlockSpec((1, d_out_p), lambda i: (0, 0)),      # resident b2
        ],
        out_specs=pl.BlockSpec((tm, d_out_p), lambda i: (i, 0)),
        compiler_params=pltpu.CompilerParams(
            dimension_semantics=("parallel",),
            vmem_limit_bytes=vmem_limit,
        ),
        cost_estimate=pl.CostEstimate(
            flops=flops, transcendentals=0, bytes_accessed=bytes_accessed),
    )(x_p, w1_t, b1_2d, w2_t, b2_2d)

    # Drop batch padding and lane padding.
    return out_p[:B, :d_out]


def reference_forward(x, w1, b1, w2, b2):
    h = jnp.maximum(x @ w1.T + b1, 0.0)
    return h @ w2.T + b2


if __name__ == "__main__":
    # Small shapes; B is intentionally NOT a multiple of the test tile so both
    # batch padding and the multi-step grid are exercised, and D_OUT is not a
    # multiple of 128 so the lane-padding path is exercised too.
    B, D_IN, H, D_OUT = 200, 32, 128, 16

    key = jax.random.PRNGKey(0)
    kx, k1, k2, k3, k4 = jax.random.split(key, 5)

    x = jax.random.normal(kx, (B, D_IN), dtype=jnp.float32)
    # PyTorch nn.Linear parameter shapes: (out_features, in_features).
    w1 = jax.random.normal(k1, (H, D_IN), dtype=jnp.float32) * 0.1
    b1 = jax.random.normal(k2, (H,), dtype=jnp.float32) * 0.1
    w2 = jax.random.normal(k3, (D_OUT, H), dtype=jnp.float32) * 0.1
    b2 = jax.random.normal(k4, (D_OUT,), dtype=jnp.float32) * 0.1

    # One-time parameter re-layout (hoisted out of the forward hot path).
    w1_t, b1_2d, w2_t, b2_2d, d_out = prepare_params(w1, b1, w2, b2)

    # block_m=64 just to force multiple grid steps at this toy batch size;
    # production default is 512 (sweep 512-1024 at real batch sizes).
    out = custom_sequential_forward(x, w1_t, b1_2d, w2_t, b2_2d,
                                    d_out=d_out, block_m=64)
    out = jax.block_until_ready(out)

    ref = reference_forward(x, w1, b1, w2, b2)
    assert out.shape == (B, D_OUT)
    # bf16 matmul operands (f32 accumulate) -> looser tolerance vs f32 reference.
    assert jnp.allclose(out, ref, atol=2e-2, rtol=2e-2), "mismatch vs reference"

    print("KERNEL_OK")
</pallas_src>

<mosaic_0001>
module attributes {stable_mosaic.version = 11 : i64} {
  func.func @_mlp_kernel(%arg0: i32, %arg1: memref<64x32xf32, #tpu.memory_space<vmem>>, %arg2: memref<32x128xbf16, #tpu.memory_space<vmem>>, %arg3: memref<1x128xf32, #tpu.memory_space<vmem>>, %arg4: memref<128x128xbf16, #tpu.memory_space<vmem>>, %arg5: memref<1x128xf32, #tpu.memory_space<vmem>>, %arg6: memref<64x128xf32, #tpu.memory_space<vmem>>) attributes {dimension_semantics = [#tpu.dimension_semantics<parallel>], iteration_bounds = array<i64: 4>, scalar_prefetch = 0 : i64, scratch_operands = 0 : i64, tpu.core_type = #tpu.core_type<tc>, window_params = [{transform_indices = @transform_0, window_bounds = array<i64: 64, 32>}, {pipeline_mode = #tpu.pipeline_mode<synchronous>, transform_indices = @transform_1, window_bounds = array<i64: 32, 128>}, {pipeline_mode = #tpu.pipeline_mode<synchronous>, transform_indices = @transform_2, window_bounds = array<i64: 1, 128>}, {pipeline_mode = #tpu.pipeline_mode<synchronous>, transform_indices = @transform_3, window_bounds = array<i64: 128, 128>}, {pipeline_mode = #tpu.pipeline_mode<synchronous>, transform_indices = @transform_4, window_bounds = array<i64: 1, 128>}, {transform_indices = @transform_5, window_bounds = array<i64: 64, 128>}]} {
    %c0 = arith.constant 0 : index
    %c0_0 = arith.constant 0 : index
    %0 = vector.load %arg1[%c0, %c0_0] : memref<64x32xf32, #tpu.memory_space<vmem>>, vector<64x32xf32>
    %1 = arith.truncf %0 : vector<64x32xf32> to vector<64x32xbf16>
    %c0_1 = arith.constant 0 : index
    %c0_2 = arith.constant 0 : index
    %2 = vector.load %arg2[%c0_1, %c0_2] : memref<32x128xbf16, #tpu.memory_space<vmem>>, vector<32x128xbf16>
    %cst = arith.constant dense<0.000000e+00> : vector<64x128xf32>
    %3 = tpu.matmul %1, %2, %cst {dimension_numbers = #tpu.dot_dimension_numbers<[1], [0], [0], [1], [0, 0, 1, 1], [], []>} : vector<64x32xbf16>, vector<32x128xbf16>, vector<64x128xf32> -> vector<64x128xf32>
    %c0_3 = arith.constant 0 : index
    %c0_4 = arith.constant 0 : index
    %4 = vector.load %arg3[%c0_3, %c0_4] : memref<1x128xf32, #tpu.memory_space<vmem>>, vector<1x128xf32>
    %5 = vector.broadcast %4 : vector<1x128xf32> to vector<64x128xf32>
    %6 = arith.addf %3, %5 : vector<64x128xf32>
    %cst_5 = arith.constant 0.000000e+00 : f32
    %7 = vector.broadcast %cst_5 : f32 to vector<64x128xf32>
    %8 = arith.maximumf %6, %7 : vector<64x128xf32>
    %9 = arith.truncf %8 : vector<64x128xf32> to vector<64x128xbf16>
    %c0_6 = arith.constant 0 : index
    %c0_7 = arith.constant 0 : index
    %10 = vector.load %arg4[%c0_6, %c0_7] : memref<128x128xbf16, #tpu.memory_space<vmem>>, vector<128x128xbf16>
    %cst_8 = arith.constant dense<0.000000e+00> : vector<64x128xf32>
    %11 = tpu.matmul %9, %10, %cst_8 {dimension_numbers = #tpu.dot_dimension_numbers<[1], [0], [0], [1], [0, 0, 1, 1], [], []>} : vector<64x128xbf16>, vector<128x128xbf16>, vector<64x128xf32> -> vector<64x128xf32>
    %c0_9 = arith.constant 0 : index
    %c0_10 = arith.constant 0 : index
    %12 = vector.load %arg5[%c0_9, %c0_10] : memref<1x128xf32, #tpu.memory_space<vmem>>, vector<1x128xf32>
    %13 = vector.broadcast %12 : vector<1x128xf32> to vector<64x128xf32>
    %14 = arith.addf %11, %13 : vector<64x128xf32>
    %c0_11 = arith.constant 0 : index
    %c0_12 = arith.constant 0 : index
    %15 = vector.load %arg6[%c0_11, %c0_12] : memref<64x128xf32, #tpu.memory_space<vmem>>, vector<64x128xf32>
    tpu.vector_store %arg6[%c0_11, %c0_12], %14 {strides = array<i32>} : memref<64x128xf32, #tpu.memory_space<vmem>>, vector<64x128xf32>,
    return
  }
  func.func @transform_0(%arg0: i32) -> (i32, i32) {
    %c0_i32 = arith.constant 0 : i32
    %c0_i32_0 = arith.constant 0 : i32
    return %arg0, %c0_i32 : i32, i32
  }
  func.func @transform_1(%arg0: i32) -> (i32, i32) {
    %c0_i32 = arith.constant 0 : i32
    %c0_i32_0 = arith.constant 0 : i32
    %c0_i32_1 = arith.constant 0 : i32
    return %c0_i32, %c0_i32_0 : i32, i32
  }
  func.func @transform_2(%arg0: i32) -> (i32, i32) {
    %c0_i32 = arith.constant 0 : i32
    %c0_i32_0 = arith.constant 0 : i32
    %c0_i32_1 = arith.constant 0 : i32
    return %c0_i32, %c0_i32_0 : i32, i32
  }
  func.func @transform_3(%arg0: i32) -> (i32, i32) {
    %c0_i32 = arith.constant 0 : i32
    %c0_i32_0 = arith.constant 0 : i32
    %c0_i32_1 = arith.constant 0 : i32
    return %c0_i32, %c0_i32_0 : i32, i32
  }
  func.func @transform_4(%arg0: i32) -> (i32, i32) {
    %c0_i32 = arith.constant 0 : i32
    %c0_i32_0 = arith.constant 0 : i32
    %c0_i32_1 = arith.constant 0 : i32
    return %c0_i32, %c0_i32_0 : i32, i32
  }
  func.func @transform_5(%arg0: i32) -> (i32, i32) {
    %c0_i32 = arith.constant 0 : i32
    %c0_i32_0 = arith.constant 0 : i32
    return %arg0, %c0_i32 : i32, i32
  }
}

</mosaic_0001>

<llo_original>
// kernel: custom_sequential_forward.1
$region0: #{custom_sequential_forward.1}
  #allocation0 [shape = 'u32[]', space=smem, size = 0x4, offset = 0x4, fixed_abs, tag = 'smem constant byte address 0x4 - core index']
  #allocation1 [shape = 'u32[144,128]{1,0:T(1,128)}', space=vmem, size = 0x12000, scoped, tag = 'internal scratch']
  %s0 = inlined_call_operand.vmem [shape: f32[256,32], index: 0, kind: input, shape index: {}]
  %s1 = inlined_call_operand.vmem [shape: bf16[32,128], index: 1, kind: input, shape index: {}]
  %s2 = inlined_call_operand.vmem [shape: f32[1,128], index: 2, kind: input, shape index: {}]
  %s3 = inlined_call_operand.vmem [shape: bf16[128,128], index: 3, kind: input, shape index: {}]
  %s4 = inlined_call_operand.vmem [shape: f32[1,128], index: 4, kind: input, shape index: {}]
  %s5 = inlined_call_operand.vmem [shape: f32[256,128], index: 5, kind: output, shape index: {}]
  %s6 = sld [smem:[#allocation0]]
  $region53: #{custom_sequential_forward.1} parent=0
    _
  %s8 = ssub.s32 1, %s6
  %s9 = scalar_select 0, %s8, %s6
  loop: start=0, step=1, limit=6
  $region2: #{custom_sequential_forward.1} parent=0 // loop_pre_header
    _
  $region3: #{custom_sequential_forward.1} parent=0 // loop_header
    %s11 = sphi 0, %s15
    %p12 = scmp.ge.s32.totalorder %s11, 6
    %s21 = sphi 0, %s23
    %s24 = sphi 0, %s21
    %s25 = sphi 0, %s24
    %s41 = sphi 0, %s25
    %s45 = sphi 0, %s45
    %s47 = sphi 0, %s45
    %s48 = sphi 0, %s47
    %s62 = sphi 0, %s48
    %s66 = sphi 0, %s66
    %s68 = sphi 0, %s66
    %s69 = sphi 0, %s68
    %s83 = sphi 0, %s69
    %s87 = sphi 0, %s87
    %s89 = sphi 0, %s87
    %s90 = sphi 0, %s89
    %s104 = sphi 0, %s90
    %s108 = sphi 0, %s108
    %s110 = sphi 0, %s108
    %s111 = sphi 0, %s110
    %s125 = sphi 0, %s111
    %s131 = sphi 0, %s133
    %s134 = sphi 0, %s131
    %s135 = sphi 0, %s134
    %s151 = sphi 0, %s135
  $region4: #{custom_sequential_forward.1} parent=0 // loop_header_branch
    %14 = sbr.rel (%p12) target = $region8
  $region5: #{custom_sequential_forward.1} parent=0 // loop_body
    %s16 = ssub.s32 %s11, 1
    %s17 = ssub.s32 %s11, 2
    %s18 = sadd.s32 %s11, 1
    %s19 = ssub.s32 %s11, %s18
    %p20 = scmp.eq.s32.totalorder %s19, 0
    %s22 = sadd.s32 %s21, 1
    %s23 = scalar_select %p20, %s21, %s22
    %p26 = pneg %p20
    %p27 = scmp.eq.s32.totalorder %s11, 3
    %p28 = por %p26, %p27
    %p29 = scmp.ne.s32.totalorder %s21, %s24
    %p30 = scmp.eq.s32.totalorder %s11, 0
    %p31 = por %p29, %p30
    %p32 = scmp.ne.s32.totalorder %s21, %s24
    %p33 = scmp.eq.s32.totalorder %s16, 3
    %p34 = por %p32, %p33
    %p35 = scmp.ne.s32.totalorder %s24, %s25
    %p36 = scmp.eq.s32.totalorder %s16, 0
    %p37 = por %p35, %p36
    %p38 = scmp.ne.s32.totalorder %s24, %s25
    %p39 = scmp.eq.s32.totalorder %s17, 3
    %p40 = por %p38, %p39
    %p42 = scmp.ne.s32.totalorder %s25, %s41
    %p43 = scmp.eq.s32.totalorder %s17, 0
    %p44 = por %p42, %p43
    %s46 = sadd.s32 %s45, 1
    %p49 = scmp.eq.s32.totalorder %s11, 3
    %p50 = scmp.ne.s32.totalorder %s45, %s47
    %p51 = scmp.eq.s32.totalorder %s11, 0
    %p52 = por %p50, %p51
    %p53 = scmp.ne.s32.totalorder %s45, %s47
    %p54 = scmp.eq.s32.totalorder %s16, 3
    %p55 = por %p53, %p54
    %p56 = scmp.ne.s32.totalorder %s47, %s48
    %p57 = scmp.eq.s32.totalorder %s16, 0
    %p58 = por %p56, %p57
    %p59 = scmp.ne.s32.totalorder %s47, %s48
    %p60 = scmp.eq.s32.totalorder %s17, 3
    %p61 = por %p59, %p60
    %p63 = scmp.ne.s32.totalorder %s48, %s62
    %p64 = scmp.eq.s32.totalorder %s17, 0
    %p65 = por %p63, %p64
    %s67 = sadd.s32 %s66, 1
    %p70 = scmp.eq.s32.totalorder %s11, 3
    %p71 = scmp.ne.s32.totalorder %s66, %s68
    %p72 = scmp.eq.s32.totalorder %s11, 0
    %p73 = por %p71, %p72
    %p74 = scmp.ne.s32.totalorder %s66, %s68
    %p75 = scmp.eq.s32.totalorder %s16, 3
    %p76 = por %p74, %p75
    %p77 = scmp.ne.s32.totalorder %s68, %s69
    %p78 = scmp.eq.s32.totalorder %s16, 0
    %p79 = por %p77, %p78
    %p80 = scmp.ne.s32.totalorder %s68, %s69
    %p81 = scmp.eq.s32.totalorder %s17, 3
    %p82 = por %p80, %p81
    %p84 = scmp.ne.s32.totalorder %s69, %s83
    %p85 = scmp.eq.s32.totalorder %s17, 0
    %p86 = por %p84, %p85
    %s88 = sadd.s32 %s87, 1
    %p91 = scmp.eq.s32.totalorder %s11, 3
    %p92 = scmp.ne.s32.totalorder %s87, %s89
    %p93 = scmp.eq.s32.totalorder %s11, 0
    %p94 = por %p92, %p93
    %p95 = scmp.ne.s32.totalorder %s87, %s89
    %p96 = scmp.eq.s32.totalorder %s16, 3
    %p97 = por %p95, %p96
    %p98 = scmp.ne.s32.totalorder %s89, %s90
    %p99 = scmp.eq.s32.totalorder %s16, 0
    %p100 = por %p98, %p99
    %p101 = scmp.ne.s32.totalorder %s89, %s90
    %p102 = scmp.eq.s32.totalorder %s17, 3
    %p103 = por %p101, %p102
    %p105 = scmp.ne.s32.totalorder %s90, %s104
    %p106 = scmp.eq.s32.totalorder %s17, 0
    %p107 = por %p105, %p106
    %s109 = sadd.s32 %s108, 1
    %p112 = scmp.eq.s32.totalorder %s11, 3
    %p113 = scmp.ne.s32.totalorder %s108, %s110
    %p114 = scmp.eq.s32.totalorder %s11, 0
    %p115 = por %p113, %p114
    %p116 = scmp.ne.s32.totalorder %s108, %s110
    %p117 = scmp.eq.s32.totalorder %s16, 3
    %p118 = por %p116, %p117
    %p119 = scmp.ne.s32.totalorder %s110, %s111
    %p120 = scmp.eq.s32.totalorder %s16, 0
    %p121 = por %p119, %p120
    %p122 = scmp.ne.s32.totalorder %s110, %s111
    %p123 = scmp.eq.s32.totalorder %s17, 3
    %p124 = por %p122, %p123
    %p126 = scmp.ne.s32.totalorder %s111, %s125
    %p127 = scmp.eq.s32.totalorder %s17, 0
    %p128 = por %p126, %p127
    %s129 = ssub.s32 %s11, %s18
    %p130 = scmp.eq.s32.totalorder %s129, 0
    %s132 = sadd.s32 %s131, 1
    %s133 = scalar_select %p130, %s131, %s132
    %p136 = pneg %p130
    %p137 = scmp.eq.s32.totalorder %s11, 3
    %p138 = por %p136, %p137
    %p139 = scmp.ne.s32.totalorder %s131, %s134
    %p140 = scmp.eq.s32.totalorder %s11, 0
    %p141 = por %p139, %p140
    %p142 = scmp.ne.s32.totalorder %s131, %s134
    %p143 = scmp.eq.s32.totalorder %s16, 3
    %p144 = por %p142, %p143
    %p145 = scmp.ne.s32.totalorder %s134, %s135
    %p146 = scmp.eq.s32.totalorder %s16, 0
    %p147 = por %p145, %p146
    %p148 = scmp.ne.s32.totalorder %s134, %s135
    %p149 = scmp.eq.s32.totalorder %s17, 3
    %p150 = por %p148, %p149
    %p152 = scmp.ne.s32.totalorder %s135, %s151
    %p153 = scmp.eq.s32.totalorder %s17, 0
    %p154 = por %p152, %p153
    %p155 = scmp.le.s32.totalorder 1, %s11
    %p156 = scmp.lt.s32.totalorder %s11, 5
    %p157 = pnand %p155, %p156
    %p158 = pneg %p157
    // Predicated region
    $region9: #{custom_sequential_forward.1} parent=5 // pred_check
      _
    $region10: #{custom_sequential_forward.1} parent=5 // pred_check_branch
      %160 = sbr.rel (%p157) target = $region12
    $region11: #{custom_sequential_forward.1} parent=5 // pred_region
      %s161 = ssub.s32 %s11, 1
      // Predicated region
      $region13: #{custom_sequential_forward.1} parent=11 // pred_check
        %p162 = pneg %p58
      $region14: #{custom_sequential_forward.1} parent=11 // pred_check_branch
        %164 = sbr.rel (%p162) target = $region16
      $region15: #{custom_sequential_forward.1} parent=11 // pred_region
        _
      $region16: #{custom_sequential_forward.1} parent=11 // pred_fallthru
        _
      // Predicated region
      $region17: #{custom_sequential_forward.1} parent=11 // pred_check
        %p165 = pneg %p79
      $region18: #{custom_sequential_forward.1} parent=11 // pred_check_branch
        %167 = sbr.rel (%p165) target = $region20
      $region19: #{custom_sequential_forward.1} parent=11 // pred_region
        _
      $region20: #{custom_sequential_forward.1} parent=11 // pred_fallthru
        _
      // Predicated region
      $region21: #{custom_sequential_forward.1} parent=11 // pred_check
        %p168 = pneg %p100
      $region22: #{custom_sequential_forward.1} parent=11 // pred_check_branch
        %170 = sbr.rel (%p168) target = $region24
      $region23: #{custom_sequential_forward.1} parent=11 // pred_region
        _
      $region24: #{custom_sequential_forward.1} parent=11 // pred_fallthru
        _
      // Predicated region
      $region25: #{custom_sequential_forward.1} parent=11 // pred_check
        %p171 = pneg %p121
      $region26: #{custom_sequential_forward.1} parent=11 // pred_check_branch
        %173 = sbr.rel (%p171) target = $region28
      $region27: #{custom_sequential_forward.1} parent=11 // pred_region
        _
      $region28: #{custom_sequential_forward.1} parent=11 // pred_fallthru
        _
    $region12: #{custom_sequential_forward.1} parent=5 // pred_fallthru
      _
    %p174 = scmp.lt.s32.totalorder %s11, 4
    // Predicated region
    $region29: #{custom_sequential_forward.1} parent=5 // pred_check
      %p175 = pneg %p174
    $region30: #{custom_sequential_forward.1} parent=5 // pred_check_branch
      %177 = sbr.rel (%p175) target = $region32
    $region31: #{custom_sequential_forward.1} parent=5 // pred_region
      // Predicated region
      $region33: #{custom_sequential_forward.1} parent=31 // pred_check
        %p178 = pneg %p31
      $region34: #{custom_sequential_forward.1} parent=31 // pred_check_branch
        %180 = sbr.rel (%p178) target = $region36
      $region35: #{custom_sequential_forward.1} parent=31 // pred_region
        %s181 = smul.u32 8, %s11
        %p182 = scmp.lt.s32.totalorder %s181, 31
        %s183 = scalar_select %p182, %s181, 31
        %s184 = smul.addr %s183, 8
        %s185 = scalar_lea.vmem %s0, %s184
        %s186 = smul.u32 8, %s11
      $region36: #{custom_sequential_forward.1} parent=31 // pred_fallthru
        _
    $region32: #{custom_sequential_forward.1} parent=5 // pred_fallthru
      _
    %p187 = scmp.le.s32.totalorder 1, %s11
    %p188 = scmp.lt.s32.totalorder %s11, 5
    %p189 = pnand %p187, %p188
    %p190 = pneg %p189
    // Predicated region
    $region37: #{custom_sequential_forward.1} parent=5 // pred_check
      _
    $region38: #{custom_sequential_forward.1} parent=5 // pred_check_branch
      %192 = sbr.rel (%p189) target = $region40
    $region39: #{custom_sequential_forward.1} parent=5 // pred_region
      %s193 = ssub.s32 %s11, 1
      %s194 = smul.u32 8, %s16
      %p195 = scmp.lt.s32.totalorder %s194, 31
      %s196 = scalar_select %p195, %s194, 31
      %s197 = smul.addr %s196, 8
      %s198 = scalar_lea.vmem %s0, %s197
      %p199 = pneg %p37
      %p200 = pneg %p34
      %p201 = pneg %p58
      %p202 = pneg %p55
      %p203 = pneg %p79
      %p204 = pneg %p76
      %p205 = pneg %p100
      %p206 = pneg %p97
      %p207 = pneg %p121
      %p208 = pneg %p118
      %p209 = pneg %p147
      %p210 = pneg %p144
      %s211 = smul.u32 8, %s16
      %p212 = scmp.lt.s32.totalorder %s211, 31
      %s213 = scalar_select %p212, %s211, 31
      %s214 = smul.addr %s213, 8
      %s215 = scalar_lea.vmem %s5, %s214
      %s216 = smul.u32 8, %s16
      %p217 = scmp.lt.s32.totalorder %s216, 31
      %s218 = scalar_select %p217, %s216, 31
      %s219 = smul.addr %s218, 8
      %s220 = scalar_lea.vmem %s0, %s219
      %s221 = smul.u32 8, %s16
      %s222 = smul.u32 8, %s16
      %p223 = scmp.lt.s32.totalorder %s222, 31
      %s224 = scalar_select %p223, %s222, 31
      %s225 = smul.addr %s224, 8
      %s226 = scalar_lea.vmem %s5, %s225
      %s227 = smul.u32 8, %s16
      %v229 = vld [vmem:[%s220] sm:$0xff]
      %v230 = vld [vmem:[%s220 + $0x8] sm:$0xff]
      %v231 = vld [vmem:[%s220 + $0x10] sm:$0xff]
      %v232 = vld [vmem:[%s220 + $0x18] sm:$0xff]
      %v233 = vld [vmem:[%s220 + $0x20] sm:$0xff]
      %v234 = vld [vmem:[%s220 + $0x28] sm:$0xff]
      %v235 = vld [vmem:[%s220 + $0x30] sm:$0xff]
      %v236 = vld [vmem:[%s220 + $0x38] sm:$0xff]
      %v237 = vpack.c.bf16 %v230, %v229
      %v238 = vpack.c.bf16 %v232, %v231
      %v239 = vpack.c.bf16 %v234, %v233
      %v240 = vpack.c.bf16 %v236, %v235
      %v241 = vld [vmem:[%s1] sm:$0xf]
      %v242 = vld [vmem:[%s1 + $0x4] sm:$0xf]
      %v243 = vld [vmem:[%s1 + $0x8] sm:$0xf]
      %v244 = vld [vmem:[%s1 + $0xc] sm:$0xf]
      %v245 = vld [vmem:[%s2] sm:$0x1]
      %v247 = vlaneseq
      %v248 = vshrl.u32 %v247, 7
      %v249 = vsub.s32 0, %v248
      %v250 = vrot.slane %v245, %v249
      %v256 = vunpack.c.l.b16 %v241
      %v257 = vunpack.c.l.b16 %v242
      %v258 = vunpack.c.l.b16 %v243
      %v259 = vunpack.c.l.b16 %v244
      %v260 = vpack.c.b16 %v257, %v256
      %v261 = vpack.c.b16 %v259, %v258
      %vm264 = vcmask 261120
      %v266 = vsel %vm264, %v237, 0
      %v269 = vsel %vm264, %v238, 0
      %v272 = vsel %vm264, %v239, 0
      %v275 = vsel %vm264, %v240, 0
      %277 = vmatprep.subr.bf16.mxu0 0
      %278 = vmatpush1.bf16.msra.mxu0 %v260
      %279 = vmatprep.subr.bf16.mxu0 0
      %280 = vmatpush1.bf16.msra.mxu0 %v261
      %281 = vmatprep.subr.bf16.mxu0 0
      %282 = vmatpush1.bf16.msra.mxu0 0
      %283 = vmatprep.subr.bf16.mxu0 0
      %284 = vmatpush1.bf16.msra.mxu0 0
      %285 = vmatprep.subr.bf16.mxu0 0
      %286 = vmatpush1.bf16.msra.mxu0 0
      %287 = vmatprep.subr.bf16.mxu0 0
      %288 = vmatpush1.bf16.msra.mxu0 0
      %289 = vmatprep.subr.bf16.mxu0 0
      %290 = vmatpush1.bf16.msra.mxu0 0
      %291 = vmatprep.subr.bf16.mxu0 0
      %292 = vmatpush1.bf16.msra.mxu0 0
      %293 = vmatprep.subr.bf16.mxu0 0
      %294 = vmatpush1.bf16.msra.mxu0 0
      %295 = vmatprep.subr.bf16.mxu0 0
      %296 = vmatpush1.bf16.msra.mxu0 0
      %297 = vmatprep.subr.bf16.mxu0 0
      %298 = vmatpush1.bf16.msra.mxu0 0
      %299 = vmatprep.subr.bf16.mxu0 0
      %300 = vmatpush1.bf16.msra.mxu0 0
      %301 = vmatprep.subr.bf16.mxu0 0
      %302 = vmatpush1.bf16.msra.mxu0 0
      %303 = vmatprep.subr.bf16.mxu0 0
      %304 = vmatpush1.bf16.msra.mxu0 0
      %305 = vmatprep.subr.bf16.mxu0 0
      %306 = vmatpush1.bf16.msra.mxu0 0
      %307 = vmatprep.subr.bf16.mxu0 0
      %308 = vmatpush1.bf16.msra.mxu0 0
      %309 = vmatprep.mubr.bf16.mxu0 0
      %310 = vmatmul.mubr.bf16.gmra.mrb[0].mxu0 %v266
      %v311 = vpop.f32.mrb[0].mxu0
      %v312 = vadd.f32 %v250, %v311
      %v313 = vpop.f32.mrb[0].mxu0
      %v314 = vpop.f32.mrb[0].mxu0
      %v315 = vadd.f32 %v250, %v314
      %v316 = vpop.f32.mrb[0].mxu0
      %317 = vmatprep.mubr.bf16.mxu0 0
      %318 = vmatmul.mubr.bf16.gmra.mrb[0].mxu0 %v269
      %v319 = vpop.f32.mrb[0].mxu0
      %v320 = vadd.f32 %v250, %v319
      %v321 = vpop.f32.mrb[0].mxu0
      %v322 = vpop.f32.mrb[0].mxu0
      %v323 = vadd.f32 %v250, %v322
      %v324 = vpop.f32.mrb[0].mxu0
      %325 = vmatprep.mubr.bf16.mxu0 0
      %326 = vmatmul.mubr.bf16.gmra.mrb[0].mxu0 %v272
      %v327 = vpop.f32.mrb[0].mxu0
      %v328 = vadd.f32 %v250, %v327
      %v329 = vpop.f32.mrb[0].mxu0
      %v330 = vpop.f32.mrb[0].mxu0
      %v331 = vadd.f32 %v250, %v330
      %v332 = vpop.f32.mrb[0].mxu0
      %333 = vmatprep.mubr.bf16.mxu0 0
      %334 = vmatmul.mubr.bf16.gmra.mrb[0].mxu0 %v275
      %v335 = vpop.f32.mrb[0].mxu0
      %v336 = vadd.f32 %v250, %v335
      %v337 = vpop.f32.mrb[0].mxu0
      %v338 = vpop.f32.mrb[0].mxu0
      %v339 = vadd.f32 %v250, %v338
      %v340 = vpop.f32.mrb[0].mxu0
      %341 = vdwg.mxu0
      %v342 = vmax.f32 %v312, 0.0
      %v343 = vmax.f32 %v315, 0.0
      %v344 = vmax.f32 %v320, 0.0
      %v345 = vmax.f32 %v323, 0.0
      %v346 = vmax.f32 %v328, 0.0
      %v347 = vmax.f32 %v331, 0.0
      %v348 = vmax.f32 %v336, 0.0
      %v349 = vmax.f32 %v339, 0.0
      %v350 = vpack.c.bf16 %v343, %v342
      %v351 = vpack.c.bf16 %v345, %v344
      %v352 = vpack.c.bf16 %v347, %v346
      %v353 = vpack.c.bf16 %v349, %v348
      %v354 = vld [vmem:[%s3] sm:$0xf]
      %v355 = vld [vmem:[%s3 + $0x4] sm:$0xf]
      %v356 = vld [vmem:[%s3 + $0x8] sm:$0xf]
      %v357 = vld [vmem:[%s3 + $0xc] sm:$0xf]
      %v358 = vld [vmem:[%s3 + $0x10] sm:$0xf]
      %v359 = vld [vmem:[%s3 + $0x14] sm:$0xf]
      %v360 = vld [vmem:[%s3 + $0x18] sm:$0xf]
      %v361 = vld [vmem:[%s3 + $0x1c] sm:$0xf]
      %v362 = vld [vmem:[%s3 + $0x20] sm:$0xf]
      %v363 = vld [vmem:[%s3 + $0x24] sm:$0xf]
      %v364 = vld [vmem:[%s3 + $0x28] sm:$0xf]
      %v365 = vld [vmem:[%s3 + $0x2c] sm:$0xf]
      %v366 = vld [vmem:[%s3 + $0x30] sm:$0xf]
      %v367 = vld [vmem:[%s3 + $0x34] sm:$0xf]
      %v368 = vld [vmem:[%s3 + $0x38] sm:$0xf]
      %v369 = vld [vmem:[%s3 + $0x3c] sm:$0xf]
      %v370 = vld [vmem:[%s4] sm:$0x1]
      %v372 = vlaneseq
      %v373 = vshrl.u32 %v372, 7
      %v374 = vsub.s32 0, %v373
      %v375 = vrot.slane %v370, %v374
      %v393 = vunpack.c.l.b16 %v354
      %v394 = vunpack.c.l.b16 %v355
      %v395 = vunpack.c.l.b16 %v356
      %v396 = vunpack.c.l.b16 %v357
      %v397 = vunpack.c.l.b16 %v358
      %v398 = vunpack.c.l.b16 %v359
      %v399 = vunpack.c.l.b16 %v360
      %v400 = vunpack.c.l.b16 %v361
      %v401 = vunpack.c.l.b16 %v362
      %v402 = vunpack.c.l.b16 %v363
      %v403 = vunpack.c.l.b16 %v364
      %v404 = vunpack.c.l.b16 %v365
      %v405 = vunpack.c.l.b16 %v366
      %v406 = vunpack.c.l.b16 %v367
      %v407 = vunpack.c.l.b16 %v368
      %v408 = vunpack.c.l.b16 %v369
      %v409 = vpack.c.b16 %v394, %v393
      %v410 = vpack.c.b16 %v396, %v395
      %v411 = vpack.c.b16 %v398, %v397
      %v412 = vpack.c.b16 %v400, %v399
      %v413 = vpack.c.b16 %v402, %v401
      %v414 = vpack.c.b16 %v404, %v403
      %v415 = vpack.c.b16 %v406, %v405
      %v416 = vpack.c.b16 %v408, %v407
      %425 = vmatprep.subr.bf16.mxu0 0
      %426 = vmatpush1.bf16.msra.mxu0 %v409
      %427 = vmatprep.subr.bf16.mxu0 0
      %428 = vmatpush1.bf16.msra.mxu0 %v410
      %429 = vmatprep.subr.bf16.mxu0 0
      %430 = vmatpush1.bf16.msra.mxu0 %v411
      %431 = vmatprep.subr.bf16.mxu0 0
      %432 = vmatpush1.bf16.msra.mxu0 %v412
      %433 = vmatprep.subr.bf16.mxu0 0
      %434 = vmatpush1.bf16.msra.mxu0 %v413
      %435 = vmatprep.subr.bf16.mxu0 0
      %436 = vmatpush1.bf16.msra.mxu0 %v414
      %437 = vmatprep.subr.bf16.mxu0 0
      %438 = vmatpush1.bf16.msra.mxu0 %v415
      %439 = vmatprep.subr.bf16.mxu0 0
      %440 = vmatpush1.bf16.msra.mxu0 %v416
      %441 = vmatprep.subr.bf16.mxu0 0
      %442 = vmatpush1.bf16.msra.mxu0 0
      %443 = vmatprep.subr.bf16.mxu0 0
      %444 = vmatpush1.bf16.msra.mxu0 0
      %445 = vmatprep.subr.bf16.mxu0 0
      %446 = vmatpush1.bf16.msra.mxu0 0
      %447 = vmatprep.subr.bf16.mxu0 0
      %448 = vmatpush1.bf16.msra.mxu0 0
      %449 = vmatprep.subr.bf16.mxu0 0
      %450 = vmatpush1.bf16.msra.mxu0 0
      %451 = vmatprep.subr.bf16.mxu0 0
      %452 = vmatpush1.bf16.msra.mxu0 0
      %453 = vmatprep.subr.bf16.mxu0 0
      %454 = vmatpush1.bf16.msra.mxu0 0
      %455 = vmatprep.subr.bf16.mxu0 0
      %456 = vmatpush1.bf16.msra.mxu0 0
      %457 = vmatprep.mubr.bf16.mxu0 0
      %458 = vmatmul.mubr.bf16.gmra.mrb[0].mxu0 %v350
      %v459 = vpop.f32.mrb[0].mxu0
      %v460 = vadd.f32 %v375, %v459
      %v461 = vpop.f32.mrb[0].mxu0
      %v462 = vpop.f32.mrb[0].mxu0
      %v463 = vadd.f32 %v375, %v462
      %v464 = vpop.f32.mrb[0].mxu0
      %465 = vmatprep.mubr.bf16.mxu0 0
      %466 = vmatmul.mubr.bf16.gmra.mrb[0].mxu0 %v351
      %v467 = vpop.f32.mrb[0].mxu0
      %v468 = vadd.f32 %v375, %v467
      %v469 = vpop.f32.mrb[0].mxu0
      %v470 = vpop.f32.mrb[0].mxu0
      %v471 = vadd.f32 %v375, %v470
      %v472 = vpop.f32.mrb[0].mxu0
      %473 = vmatprep.mubr.bf16.mxu0 0
      %474 = vmatmul.mubr.bf16.gmra.mrb[0].mxu0 %v352
      %v475 = vpop.f32.mrb[0].mxu0
      %v476 = vadd.f32 %v375, %v475
      %v477 = vpop.f32.mrb[0].mxu0
      %v478 = vpop.f32.mrb[0].mxu0
      %v479 = vadd.f32 %v375, %v478
      %v480 = vpop.f32.mrb[0].mxu0
      %481 = vmatprep.mubr.bf16.mxu0 0
      %482 = vmatmul.mubr.bf16.gmra.mrb[0].mxu0 %v353
      %v483 = vpop.f32.mrb[0].mxu0
      %v484 = vadd.f32 %v375, %v483
      %v485 = vpop.f32.mrb[0].mxu0
      %v486 = vpop.f32.mrb[0].mxu0
      %v487 = vadd.f32 %v375, %v486
      %v488 = vpop.f32.mrb[0].mxu0
      %489 = vdwg.mxu0
      %490 = vst [vmem:[%s226] sm:$0xff] %v460
      %491 = vst [vmem:[%s226 + $0x8] sm:$0xff] %v463
      %492 = vst [vmem:[%s226 + $0x10] sm:$0xff] %v468
      %493 = vst [vmem:[%s226 + $0x18] sm:$0xff] %v471
      %494 = vst [vmem:[%s226 + $0x20] sm:$0xff] %v476
      %495 = vst [vmem:[%s226 + $0x28] sm:$0xff] %v479
      %496 = vst [vmem:[%s226 + $0x30] sm:$0xff] %v484
      %497 = vst [vmem:[%s226 + $0x38] sm:$0xff] %v487
      %s498 = smul.u32 8, %s16
      %p499 = scmp.lt.s32.totalorder %s498, 31
      %s500 = scalar_select %p499, %s498, 31
      %s501 = smul.addr %s500, 8
      %s502 = scalar_lea.vmem %s5, %s501
      // Predicated region
      $region41: #{custom_sequential_forward.1} parent=39 // pred_check
        %p503 = pneg %p144
      $region42: #{custom_sequential_forward.1} parent=39 // pred_check_branch
        %505 = sbr.rel (%p503) target = $region44
      $region43: #{custom_sequential_forward.1} parent=39 // pred_region
        %s506 = smul.u32 8, %s16
      $region44: #{custom_sequential_forward.1} parent=39 // pred_fallthru
        _
    $region40: #{custom_sequential_forward.1} parent=5 // pred_fallthru
      _
    %p507 = scmp.le.s32.totalorder 2, %s11
    // Predicated region
    $region45: #{custom_sequential_forward.1} parent=5 // pred_check
      %p508 = pneg %p507
    $region46: #{custom_sequential_forward.1} parent=5 // pred_check_branch
      %510 = sbr.rel (%p508) target = $region48
    $region47: #{custom_sequential_forward.1} parent=5 // pred_region
      %s511 = ssub.s32 %s11, 2
      // Predicated region
      $region49: #{custom_sequential_forward.1} parent=47 // pred_check
        %p512 = pneg %p150
      $region50: #{custom_sequential_forward.1} parent=47 // pred_check_branch
        %514 = sbr.rel (%p512) target = $region52
      $region51: #{custom_sequential_forward.1} parent=47 // pred_region
        %s515 = smul.u32 8, %s17
        %p516 = scmp.lt.s32.totalorder %s515, 31
        %s517 = scalar_select %p516, %s515, 31
        %s518 = smul.addr %s517, 8
        %s519 = scalar_lea.vmem %s5, %s518
      $region52: #{custom_sequential_forward.1} parent=47 // pred_fallthru
        _
    $region48: #{custom_sequential_forward.1} parent=5 // pred_fallthru
      _
  $region6: #{custom_sequential_forward.1} parent=0 // loop_footer
    %s15 = sadd.s32 1, %s11
  $region7: #{custom_sequential_forward.1} parent=0 // loop_footer_branch
    %10 = sbr.rel target = $region3
  $region8: #{custom_sequential_forward.1} parent=0 // loop_exit
    _

</llo_original>
